<compile_context>
chip_gen: v5e
topology: v5e:2x2
jax: 0.10.0
libtpu: 0.0.40
codegen_flags: <defaults>
</compile_context>

<pallas_src>
import functools

import jax
import jax.numpy as jnp
from jax import lax
from jax.experimental import pallas as pl
from jax.experimental.pallas import tpu as pltpu


LANES = 128
MAX_TILE_ROWS = 1024   # 1024 x 128 f32 = 512 KiB per input block
NUM_SLICES = 2         # split the reduction for v7x's two TensorCores


def _dice_kernel(yt_ref, yp_ref, out_ref, acc_ref, *,
                 main_rows, steps_per_slice, needs_mask):
    """Accumulate sum(yt*yp) and sum(yt+yp) into a VMEM vector accumulator.

    Grid is (slice, step). acc_ref is a per-core (2, tile_rows, 128) f32 scratch;
    out_ref is this slice's (1, 2, 1, 128) partial-sum block, written once at the
    last step.
    """
    c = pl.program_id(0)            # slice (parallel across cores on v7x)
    i = pl.program_id(1)            # sequential reduction step within the slice

    @pl.when(i == 0)
    def _():
        acc_ref[...] = jnp.zeros_like(acc_ref)

    yt = yt_ref[...].astype(jnp.float32)
    yp = yp_ref[...].astype(jnp.float32)

    if needs_mask:
        # Zero out rows past the end of the data (partial last block and/or
        # fully-redundant blocks created by the 2-way slice split).
        tile_rows = yt_ref.shape[0]
        row_start = (c * steps_per_slice + i) * tile_rows
        rid = row_start + lax.broadcasted_iota(jnp.int32, yt.shape, 0)
        valid = rid < main_rows
        yt = jnp.where(valid, yt, 0.0)
        yp = jnp.where(valid, yp, 0.0)

    # Pure element-wise VPU adds per step — free filler under the input DMA.
    acc_ref[0] += yt * yp     # intersection terms
    acc_ref[1] += yt + yp     # denominator terms (sum(yt) + sum(yp))

    @pl.when(i == pl.num_programs(1) - 1)
    def _():
        # Single cross-sublane reduction per slice; final cross-lane reduction
        # (over 2*128 values) and the division happen in the wrapper.
        out_ref[0, 0] = jnp.sum(acc_ref[0], axis=0, keepdims=True)
        out_ref[0, 1] = jnp.sum(acc_ref[1], axis=0, keepdims=True)


def dice_coeff(y_true, y_pred, smooth: float = 1.0):
    """Pallas equivalent of DiceCoeff.forward(y_true, y_pred). Returns a scalar f32."""
    assert y_true.shape == y_pred.shape, "y_true and y_pred must have the same shape"
    smooth = float(smooth)

    yt = jnp.ravel(y_true)
    yp = jnp.ravel(y_pred)
    n = yt.shape[0]

    # Rows of 128 lanes, rounded down to a multiple of 8 sublanes -> kernel part.
    main_rows = (n // (8 * LANES)) * 8
    main_elems = main_rows * LANES

    # Tiny tail (< 8*128 + 127 elements) reduced with plain jnp.
    if main_elems < n:
        yt_t = yt[main_elems:].astype(jnp.float32)
        yp_t = yp[main_elems:].astype(jnp.float32)
        inter_tail = jnp.sum(yt_t * yp_t)
        total_tail = jnp.sum(yt_t) + jnp.sum(yp_t)
    else:
        inter_tail = jnp.float32(0.0)
        total_tail = jnp.float32(0.0)

    if main_rows == 0:
        # Input too small for a single (8,128) block: pure-jnp path (still exact).
        return (2.0 * inter_tail + smooth) / (total_tail + smooth)

    # Free bitcast when main_elems == n (no wrapper-side copy, no dtype cast).
    yt_main = yt if main_elems == n else yt[:main_elems]
    yp_main = yp if main_elems == n else yp[:main_elems]
    yt2 = yt_main.reshape(main_rows, LANES)
    yp2 = yp_main.reshape(main_rows, LANES)

    tile_rows = min(MAX_TILE_ROWS, main_rows)          # multiple of 8
    total_steps = pl.cdiv(main_rows, tile_rows)        # row blocks in the data
    steps_per_slice = pl.cdiv(total_steps, NUM_SLICES)
    needs_mask = (NUM_SLICES * steps_per_slice * tile_rows) != main_rows

    kernel = functools.partial(
        _dice_kernel,
        main_rows=main_rows,
        steps_per_slice=steps_per_slice,
        needs_mask=needs_mask,
    )

    def in_map(c, i):
        # Clamp so redundant steps (from the 2-way split / uneven division) never
        # request an out-of-range block; their contribution is zero-masked anyway.
        return (jnp.minimum(c * steps_per_slice + i, total_steps - 1), 0)

    partials = pl.pallas_call(
        kernel,
        out_shape=jax.ShapeDtypeStruct((NUM_SLICES, 2, 1, LANES), jnp.float32),
        grid_spec=pltpu.PrefetchScalarGridSpec(
            num_scalar_prefetch=0,
            grid=(NUM_SLICES, steps_per_slice),
            in_specs=[
                pl.BlockSpec((tile_rows, LANES), in_map),
                pl.BlockSpec((tile_rows, LANES), in_map),
            ],
            out_specs=pl.BlockSpec((1, 2, 1, LANES), lambda c, i: (c, 0, 0, 0)),
            scratch_shapes=[pltpu.VMEM((2, tile_rows, LANES), jnp.float32)],
        ),
        compiler_params=pltpu.CompilerParams(
            dimension_semantics=("parallel", "arbitrary"),
        ),
    )(yt2, yp2)

    inter = jnp.sum(partials[:, 0]) + inter_tail
    total = jnp.sum(partials[:, 1]) + total_tail
    return (2.0 * inter + smooth) / (total + smooth)


if __name__ == "__main__":
    key = jax.random.PRNGKey(0)
    k1, k2 = jax.random.split(key)

    # Small shapes consistent with a segmentation mask / prediction pair (NCHW).
    shape = (2, 4, 16, 16)
    y_true = (jax.random.uniform(k1, shape) > 0.5).astype(jnp.float32)
    y_pred = jax.random.uniform(k2, shape, dtype=jnp.float32)

    result = dice_coeff(y_true, y_pred, smooth=1.0)
    result = jax.block_until_ready(result)

    # Pure-JAX reference check (same math as the PyTorch forward).
    yt_f = y_true.ravel()
    yp_f = y_pred.ravel()
    ref = (2.0 * jnp.sum(yt_f * yp_f) + 1.0) / (jnp.sum(yt_f) + jnp.sum(yp_f) + 1.0)
    assert jnp.allclose(result, ref, rtol=1e-5, atol=1e-6), (result, ref)

    print("KERNEL_OK")
</pallas_src>

<mosaic_0001>
module attributes {stable_mosaic.version = 11 : i64} {
  func.func @_dice_kernel(%arg0: i32, %arg1: i32, %arg2: memref<16x128xf32, #tpu.memory_space<vmem>>, %arg3: memref<16x128xf32, #tpu.memory_space<vmem>>, %arg4: memref<1x2x1x128xf32, #tpu.memory_space<vmem>>, %arg5: memref<2x16x128xf32, #tpu.memory_space<vmem>>) attributes {dimension_semantics = [#tpu.dimension_semantics<parallel>, #tpu.dimension_semantics<arbitrary>], iteration_bounds = array<i64: 2, 1>, scalar_prefetch = 0 : i64, scratch_operands = 1 : i64, tpu.core_type = #tpu.core_type<tc>, window_params = [{transform_indices = @transform_0, window_bounds = array<i64: 16, 128>}, {transform_indices = @transform_1, window_bounds = array<i64: 16, 128>}, {transform_indices = @transform_2, window_bounds = array<i64: 1, 2, 1, 128>}]} {
    %c0_i32 = arith.constant 0 : i32
    %0 = arith.cmpi eq, %arg1, %c0_i32 : i32
    %1 = arith.extui %0 : i1 to i32
    %c0_i32_0 = arith.constant 0 : i32
    %2 = arith.cmpi ne, %1, %c0_i32_0 : i32
    scf.if %2 {
      %cst_19 = arith.constant 0.000000e+00 : f32
      %34 = vector.broadcast %cst_19 : f32 to vector<2x16x128xf32>
      %c0_20 = arith.constant 0 : index
      %c0_21 = arith.constant 0 : index
      %c0_22 = arith.constant 0 : index
      %35 = vector.load %arg5[%c0_20, %c0_21, %c0_22] : memref<2x16x128xf32, #tpu.memory_space<vmem>>, vector<2x16x128xf32>
      tpu.vector_store %arg5[%c0_20, %c0_21, %c0_22], %34 {strides = array<i32>} : memref<2x16x128xf32, #tpu.memory_space<vmem>>, vector<2x16x128xf32>,
    } else {
    }
    %c0 = arith.constant 0 : index
    %c0_1 = arith.constant 0 : index
    %3 = vector.load %arg2[%c0, %c0_1] : memref<16x128xf32, #tpu.memory_space<vmem>>, vector<16x128xf32>
    %c0_2 = arith.constant 0 : index
    %c0_3 = arith.constant 0 : index
    %4 = vector.load %arg3[%c0_2, %c0_3] : memref<16x128xf32, #tpu.memory_space<vmem>>, vector<16x128xf32>
    %c1_i32 = arith.constant 1 : i32
    %5 = arith.muli %arg0, %c1_i32 : i32
    %6 = arith.addi %5, %arg1 : i32
    %c16_i32 = arith.constant 16 : i32
    %7 = arith.muli %6, %c16_i32 : i32
    %8 = tpu.iota {dimensions = array<i32: 0>} : vector<16x128xi32>
    %9 = vector.broadcast %7 : i32 to vector<16x128xi32>
    %10 = arith.addi %9, %8 : vector<16x128xi32>
    %c16_i32_4 = arith.constant 16 : i32
    %11 = vector.broadcast %c16_i32_4 : i32 to vector<16x128xi32>
    %12 = arith.cmpi slt, %10, %11 : vector<16x128xi32>
    %cst = arith.constant 0.000000e+00 : f32
    %13 = vector.broadcast %cst : f32 to vector<16x128xf32>
    %14 = arith.select %12, %3, %13 : vector<16x128xi1>, vector<16x128xf32>
    %cst_5 = arith.constant 0.000000e+00 : f32
    %15 = vector.broadcast %cst_5 : f32 to vector<16x128xf32>
    %16 = arith.select %12, %4, %15 : vector<16x128xi1>, vector<16x128xf32>
    %c0_6 = arith.constant 0 : index
    %c0_7 = arith.constant 0 : index
    %c0_8 = arith.constant 0 : index
    %17 = vector.load %arg5[%c0_6, %c0_7, %c0_8] : memref<2x16x128xf32, #tpu.memory_space<vmem>>, vector<1x16x128xf32>
    %18 = vector.shape_cast %17 : vector<1x16x128xf32> to vector<16x128xf32>
    %19 = arith.mulf %14, %16 : vector<16x128xf32>
    %20 = arith.addf %18, %19 : vector<16x128xf32>
    %c0_9 = arith.constant 0 : index
    %c0_10 = arith.constant 0 : index
    %c0_11 = arith.constant 0 : index
    %21 = vector.load %arg5[%c0_9, %c0_10, %c0_11] : memref<2x16x128xf32, #tpu.memory_space<vmem>>, vector<1x16x128xf32>
    %22 = vector.shape_cast %21 : vector<1x16x128xf32> to vector<16x128xf32>
    %23 = vector.shape_cast %20 : vector<16x128xf32> to vector<1x16x128xf32>
    tpu.vector_store %arg5[%c0_9, %c0_10, %c0_11], %23 {strides = array<i32>} : memref<2x16x128xf32, #tpu.memory_space<vmem>>, vector<1x16x128xf32>,
    %c1 = arith.constant 1 : index
    %c0_12 = arith.constant 0 : index
    %c0_13 = arith.constant 0 : index
    %24 = vector.load %arg5[%c1, %c0_12, %c0_13] : memref<2x16x128xf32, #tpu.memory_space<vmem>>, vector<1x16x128xf32>
    %25 = vector.shape_cast %24 : vector<1x16x128xf32> to vector<16x128xf32>
    %26 = arith.addf %14, %16 : vector<16x128xf32>
    %27 = arith.addf %25, %26 : vector<16x128xf32>
    %c1_14 = arith.constant 1 : index
    %c0_15 = arith.constant 0 : index
    %c0_16 = arith.constant 0 : index
    %28 = vector.load %arg5[%c1_14, %c0_15, %c0_16] : memref<2x16x128xf32, #tpu.memory_space<vmem>>, vector<1x16x128xf32>
    %29 = vector.shape_cast %28 : vector<1x16x128xf32> to vector<16x128xf32>
    %30 = vector.shape_cast %27 : vector<16x128xf32> to vector<1x16x128xf32>
    tpu.vector_store %arg5[%c1_14, %c0_15, %c0_16], %30 {strides = array<i32>} : memref<2x16x128xf32, #tpu.memory_space<vmem>>, vector<1x16x128xf32>,
    %c0_i32_17 = arith.constant 0 : i32
    %31 = arith.cmpi eq, %arg1, %c0_i32_17 : i32
    %32 = arith.extui %31 : i1 to i32
    %c0_i32_18 = arith.constant 0 : i32
    %33 = arith.cmpi ne, %32, %c0_i32_18 : i32
    scf.if %33 {
      %c0_19 = arith.constant 0 : index
      %c0_20 = arith.constant 0 : index
      %c0_21 = arith.constant 0 : index
      %34 = vector.load %arg5[%c0_19, %c0_20, %c0_21] : memref<2x16x128xf32, #tpu.memory_space<vmem>>, vector<1x16x128xf32>
      %35 = vector.shape_cast %34 : vector<1x16x128xf32> to vector<16x128xf32>
      %cst_22 = arith.constant dense<0.000000e+00> : vector<128xf32>
      %36 = vector.multi_reduction <add>, %35, %cst_22 [0] : vector<16x128xf32> to vector<128xf32>
      %37 = vector.shape_cast %36 : vector<128xf32> to vector<1x128xf32>
      %c0_23 = arith.constant 0 : index
      %c0_24 = arith.constant 0 : index
      %c0_25 = arith.constant 0 : index
      %c0_26 = arith.constant 0 : index
      %38 = vector.load %arg4[%c0_23, %c0_24, %c0_25, %c0_26] : memref<1x2x1x128xf32, #tpu.memory_space<vmem>>, vector<1x1x1x128xf32>
      %39 = vector.shape_cast %38 : vector<1x1x1x128xf32> to vector<1x128xf32>
      %40 = vector.shape_cast %37 : vector<1x128xf32> to vector<1x1x1x128xf32>
      tpu.vector_store %arg4[%c0_23, %c0_24, %c0_25, %c0_26], %40 {strides = array<i32>} : memref<1x2x1x128xf32, #tpu.memory_space<vmem>>, vector<1x1x1x128xf32>,
      %c1_27 = arith.constant 1 : index
      %c0_28 = arith.constant 0 : index
      %c0_29 = arith.constant 0 : index
      %41 = vector.load %arg5[%c1_27, %c0_28, %c0_29] : memref<2x16x128xf32, #tpu.memory_space<vmem>>, vector<1x16x128xf32>
      %42 = vector.shape_cast %41 : vector<1x16x128xf32> to vector<16x128xf32>
      %cst_30 = arith.constant dense<0.000000e+00> : vector<128xf32>
      %43 = vector.multi_reduction <add>, %42, %cst_30 [0] : vector<16x128xf32> to vector<128xf32>
      %44 = vector.shape_cast %43 : vector<128xf32> to vector<1x128xf32>
      %c0_31 = arith.constant 0 : index
      %c1_32 = arith.constant 1 : index
      %c0_33 = arith.constant 0 : index
      %c0_34 = arith.constant 0 : index
      %45 = vector.load %arg4[%c0_31, %c1_32, %c0_33, %c0_34] : memref<1x2x1x128xf32, #tpu.memory_space<vmem>>, vector<1x1x1x128xf32>
      %46 = vector.shape_cast %45 : vector<1x1x1x128xf32> to vector<1x128xf32>
      %47 = vector.shape_cast %44 : vector<1x128xf32> to vector<1x1x1x128xf32>
      tpu.vector_store %arg4[%c0_31, %c1_32, %c0_33, %c0_34], %47 {strides = array<i32>} : memref<1x2x1x128xf32, #tpu.memory_space<vmem>>, vector<1x1x1x128xf32>,
    } else {
    }
    return
  }
  func.func @transform_0(%arg0: i32, %arg1: i32) -> (i32, i32) {
    %c1_i32 = arith.constant 1 : i32
    %0 = arith.muli %arg0, %c1_i32 : i32
    %1 = arith.addi %0, %arg1 : i32
    %c0_i32 = arith.constant 0 : i32
    %2 = arith.minsi %1, %c0_i32 : i32
    %c0_i32_0 = arith.constant 0 : i32
    %c0_i32_1 = arith.constant 0 : i32
    return %2, %c0_i32_0 : i32, i32
  }
  func.func @transform_1(%arg0: i32, %arg1: i32) -> (i32, i32) {
    %c1_i32 = arith.constant 1 : i32
    %0 = arith.muli %arg0, %c1_i32 : i32
    %1 = arith.addi %0, %arg1 : i32
    %c0_i32 = arith.constant 0 : i32
    %2 = arith.minsi %1, %c0_i32 : i32
    %c0_i32_0 = arith.constant 0 : i32
    %c0_i32_1 = arith.constant 0 : i32
    return %2, %c0_i32_0 : i32, i32
  }
  func.func @transform_2(%arg0: i32, %arg1: i32) -> (i32, i32, i32, i32) {
    %c0_i32 = arith.constant 0 : i32
    %c0_i32_0 = arith.constant 0 : i32
    %c0_i32_1 = arith.constant 0 : i32
    %c0_i32_2 = arith.constant 0 : i32
    return %arg0, %c0_i32, %c0_i32_0, %c0_i32_1 : i32, i32, i32, i32
  }
}

</mosaic_0001>

<llo_original>
// kernel: tpu_custom_call.1
$region0: #{tpu_custom_call.1}
  #allocation0 [shape = 'u32[]', space=smem, size = 0x4, offset = 0x4, fixed_abs, tag = 'smem constant byte address 0x4 - core index']
  #allocation1 [shape = 'u32[72,128]{1,0:T(1,128)}', space=vmem, size = 0x9000, scoped, tag = 'internal scratch']
  #allocation2 [shape = 'f32[2,16,128]{2,1,0:T(8,128)}', space=vmem, size = 0x4000, scoped, tag = 'scratch operand']
  %s0 = inlined_call_operand.hbm [shape: f32[16,128], index: 0, kind: input, shape index: {}]
  %s1 = inlined_call_operand.hbm [shape: f32[16,128], index: 1, kind: input, shape index: {}]
  %s2 = inlined_call_operand.hbm [shape: f32[2,2,1,128], index: 2, kind: output, shape index: {}]
  %s3 = sld [smem:[#allocation0]]
  $region57: #{tpu_custom_call.1} parent=0
    _
  %s5 = ssub.s32 1, %s3
  %s6 = scalar_select 0, %s5, %s3
  $region1: #{tpu_custom_call.1} parent=0
    #allocation3 [shape = 'u8[16384]{0}', space=vmem, size = 0x4000, scoped, tag = 'input window, operand 0']
    #allocation4 [shape = 's32[2]{0}', space=sflag, size = 0x8, scoped, tag = 'scoped memory for tpu_custom_call.1']
    #allocation5 [shape = 's32[2]{0}', space=sflag, size = 0x8, scoped, tag = 'scoped memory for tpu_custom_call.1']
    #allocation6 [shape = 'u8[16384]{0}', space=vmem, size = 0x4000, scoped, tag = 'input window, operand 1']
    #allocation7 [shape = 's32[2]{0}', space=sflag, size = 0x8, scoped, tag = 'scoped memory for tpu_custom_call.1']
    #allocation8 [shape = 'u8[2048]{0}', space=vmem, size = 0x800, scoped, tag = 'output window, operand 0']
    %7 = vsyncpa [#allocation4], 0
    %s8 = scalar_lea.sflag [#allocation4], 1
    %9 = vsyncpa %s8, 0
    %10 = vsyncpa [#allocation7], 0
    %s11 = scalar_lea.sflag [#allocation7], 1
    %12 = vsyncpa %s11, 0
    %13 = vsyncpa [#allocation5], 0
    %s14 = scalar_lea.sflag [#allocation5], 1
    %15 = vsyncpa %s14, 0
    loop: start=0, step=1, limit=4
    $region2: #{tpu_custom_call.1} parent=1 // loop_pre_header
      _
    $region3: #{tpu_custom_call.1} parent=1 // loop_header
      %s17 = sphi 0, %s21
      %p18 = scmp.ge.s32.totalorder %s17, 4
      %s24 = sphi 0, %s36
      %s25 = sphi 0, %s32
      %s26 = sphi 0, %s24
      %s27 = sphi 0, %s25
      %s28 = sphi 0, %s26
      %s29 = sphi 0, %s27
      %s45 = sphi 0, %s47
      %s48 = sphi 0, %s45
      %s49 = sphi 0, %s48
      %s65 = sphi 0, %s49
      %s77 = sphi 0, %s79
      %s80 = sphi 0, %s77
      %s81 = sphi 0, %s80
      %s97 = sphi 0, %s81
      %s103 = sphi 0, %s105
      %s106 = sphi 0, %s103
      %s107 = sphi 0, %s106
      %s123 = sphi 0, %s107
    $region4: #{tpu_custom_call.1} parent=1 // loop_header_branch
      %20 = sbr.rel (%p18) target = $region8
    $region5: #{tpu_custom_call.1} parent=1 // loop_body
      %s22 = ssub.s32 %s17, 1
      %s23 = ssub.s32 %s17, 2
      %s30 = sadd.s32 1, %s25
      %p31 = scmp.ge.s32.totalorder %s30, 1
      %s32 = scalar_select %p31, 0, %s30
      %s33 = sadd.s32 1, %s24
      %s34 = scalar_select %p31, %s33, %s24
      %p35 = scmp.ge.s32.totalorder %s34, 2
      %s36 = scalar_select %p35, 0, %s34
      %s37 = sadd.s32 %s24, %s25
      %p38 = scmp.lt.s32.totalorder %s37, 0
      %s39 = scalar_select %p38, %s37, 0
      %s40 = sadd.s32 %s36, %s32
      %p41 = scmp.lt.s32.totalorder %s40, 0
      %s42 = scalar_select %p41, %s40, 0
      %s43 = ssub.s32 %s39, %s42
      %p44 = scmp.eq.s32.totalorder %s43, 0
      %s46 = sadd.s32 %s45, 1
      %s47 = scalar_select %p44, %s45, %s46
      %p50 = pneg %p44
      %p51 = scmp.eq.s32.totalorder %s17, 1
      %p52 = por %p50, %p51
      %p53 = scmp.ne.s32.totalorder %s45, %s48
      %p54 = scmp.eq.s32.totalorder %s17, 0
      %p55 = por %p53, %p54
      %p56 = scmp.ne.s32.totalorder %s45, %s48
      %p57 = scmp.eq.s32.totalorder %s22, 1
      %p58 = por %p56, %p57
      %p59 = scmp.ne.s32.totalorder %s48, %s49
      %p60 = scmp.eq.s32.totalorder %s22, 0
      %p61 = por %p59, %p60
      %p62 = scmp.ne.s32.totalorder %s48, %s49
      %p63 = scmp.eq.s32.totalorder %s23, 1
      %p64 = por %p62, %p63
      %p66 = scmp.ne.s32.totalorder %s49, %s65
      %p67 = scmp.eq.s32.totalorder %s23, 0
      %p68 = por %p66, %p67
      %s69 = sadd.s32 %s24, %s25
      %p70 = scmp.lt.s32.totalorder %s69, 0
      %s71 = scalar_select %p70, %s69, 0
      %s72 = sadd.s32 %s36, %s32
      %p73 = scmp.lt.s32.totalorder %s72, 0
      %s74 = scalar_select %p73, %s72, 0
      %s75 = ssub.s32 %s71, %s74
      %p76 = scmp.eq.s32.totalorder %s75, 0
      %s78 = sadd.s32 %s77, 1
      %s79 = scalar_select %p76, %s77, %s78
      %p82 = pneg %p76
      %p83 = scmp.eq.s32.totalorder %s17, 1
      %p84 = por %p82, %p83
      %p85 = scmp.ne.s32.totalorder %s77, %s80
      %p86 = scmp.eq.s32.totalorder %s17, 0
      %p87 = por %p85, %p86
      %p88 = scmp.ne.s32.totalorder %s77, %s80
      %p89 = scmp.eq.s32.totalorder %s22, 1
      %p90 = por %p88, %p89
      %p91 = scmp.ne.s32.totalorder %s80, %s81
      %p92 = scmp.eq.s32.totalorder %s22, 0
      %p93 = por %p91, %p92
      %p94 = scmp.ne.s32.totalorder %s80, %s81
      %p95 = scmp.eq.s32.totalorder %s23, 1
      %p96 = por %p94, %p95
      %p98 = scmp.ne.s32.totalorder %s81, %s97
      %p99 = scmp.eq.s32.totalorder %s23, 0
      %p100 = por %p98, %p99
      %s101 = ssub.s32 %s24, %s36
      %p102 = scmp.eq.s32.totalorder %s101, 0
      %s104 = sadd.s32 %s103, 1
      %s105 = scalar_select %p102, %s103, %s104
      %p108 = pneg %p102
      %p109 = scmp.eq.s32.totalorder %s17, 1
      %p110 = por %p108, %p109
      %p111 = scmp.ne.s32.totalorder %s103, %s106
      %p112 = scmp.eq.s32.totalorder %s17, 0
      %p113 = por %p111, %p112
      %p114 = scmp.ne.s32.totalorder %s103, %s106
      %p115 = scmp.eq.s32.totalorder %s22, 1
      %p116 = por %p114, %p115
      %p117 = scmp.ne.s32.totalorder %s106, %s107
      %p118 = scmp.eq.s32.totalorder %s22, 0
      %p119 = por %p117, %p118
      %p120 = scmp.ne.s32.totalorder %s106, %s107
      %p121 = scmp.eq.s32.totalorder %s23, 1
      %p122 = por %p120, %p121
      %p124 = scmp.ne.s32.totalorder %s107, %s123
      %p125 = scmp.eq.s32.totalorder %s23, 0
      %p126 = por %p124, %p125
      %p127 = scmp.le.s32.totalorder 1, %s17
      %p128 = scmp.lt.s32.totalorder %s17, 3
      %p129 = pnand %p127, %p128
      %p130 = pneg %p129
      // Predicated region
      $region9: #{tpu_custom_call.1} parent=5 // pred_check
        _
      $region10: #{tpu_custom_call.1} parent=5 // pred_check_branch
        %132 = sbr.rel (%p129) target = $region12
      $region11: #{tpu_custom_call.1} parent=5 // pred_region
        %s133 = ssub.s32 %s17, 1
      $region12: #{tpu_custom_call.1} parent=5 // pred_fallthru
        _
      %p134 = scmp.lt.s32.totalorder %s17, 2
      // Predicated region
      $region13: #{tpu_custom_call.1} parent=5 // pred_check
        %p135 = pneg %p134
      $region14: #{tpu_custom_call.1} parent=5 // pred_check_branch
        %137 = sbr.rel (%p135) target = $region16
      $region15: #{tpu_custom_call.1} parent=5 // pred_region
        // Predicated region
        $region17: #{tpu_custom_call.1} parent=15 // pred_check
          %p138 = pneg %p55
        $region18: #{tpu_custom_call.1} parent=15 // pred_check_branch
          %140 = sbr.rel (%p138) target = $region20
        $region19: #{tpu_custom_call.1} parent=15 // pred_region
          %s141 = sand.u32 %s45, 1
          %s142 = scalar_lea.sflag [#allocation4], %s141
          %s143 = sand.u32 %s45, 1
          %s144 = smul.addr %s143, 16
          %s145 = scalar_lea.vmem [#allocation3], %s144
          %s146 = sadd.s32 %s24, %s25
          %p147 = scmp.lt.s32.totalorder %s146, 0
          %s148 = scalar_select %p147, %s146, 0
          %s149 = smul.u32 2, %s148
          %151 = vsyncadd %s142, 0
          %s152 = smul.addr %s149, 8
          %s153 = scalar_lea.hbm %s0, %s152
          %s154 = sshll.u32 %s153, 4
          %s155 = int_to_ptr.hbm [resolvable:$true] %s154
          %s156 = sshll.u32 %s145, 4
          %s157 = int_to_ptr.vmem [resolvable:$true] %s156
          %162 = dma.hbm_to_vmem [thread:$0]  %s155, 256, %s157, %s142, 128, 128, 8
        $region20: #{tpu_custom_call.1} parent=15 // pred_fallthru
          _
        // Predicated region
        $region21: #{tpu_custom_call.1} parent=15 // pred_check
          %p163 = pneg %p87
        $region22: #{tpu_custom_call.1} parent=15 // pred_check_branch
          %165 = sbr.rel (%p163) target = $region24
        $region23: #{tpu_custom_call.1} parent=15 // pred_region
          %s166 = sand.u32 %s77, 1
          %s167 = scalar_lea.sflag [#allocation7], %s166
          %s168 = sand.u32 %s77, 1
          %s169 = smul.addr %s168, 16
          %s170 = scalar_lea.vmem [#allocation6], %s169
          %s171 = sadd.s32 %s24, %s25
          %p172 = scmp.lt.s32.totalorder %s171, 0
          %s173 = scalar_select %p172, %s171, 0
          %s174 = smul.u32 2, %s173
          %176 = vsyncadd %s167, 0
          %s177 = smul.addr %s174, 8
          %s178 = scalar_lea.hbm %s1, %s177
          %s179 = sshll.u32 %s178, 4
          %s180 = int_to_ptr.hbm [resolvable:$true] %s179
          %s181 = sshll.u32 %s170, 4
          %s182 = int_to_ptr.vmem [resolvable:$true] %s181
          %187 = dma.hbm_to_vmem [thread:$0]  %s180, 256, %s182, %s167, 128, 128, 8
        $region24: #{tpu_custom_call.1} parent=15 // pred_fallthru
          _
      $region16: #{tpu_custom_call.1} parent=5 // pred_fallthru
        _
      %p188 = scmp.le.s32.totalorder 1, %s17
      %p189 = scmp.lt.s32.totalorder %s17, 3
      %p190 = pnand %p188, %p189
      %p191 = pneg %p190
      // Predicated region
      $region25: #{tpu_custom_call.1} parent=5 // pred_check
        _
      $region26: #{tpu_custom_call.1} parent=5 // pred_check_branch
        %193 = sbr.rel (%p190) target = $region28
      $region27: #{tpu_custom_call.1} parent=5 // pred_region
        %s194 = ssub.s32 %s17, 1
        %s195 = sand.u32 %s48, 1
        %s196 = scalar_lea.sflag [#allocation4], %s195
        %s197 = sand.u32 %s48, 1
        %s198 = smul.addr %s197, 16
        %s199 = scalar_lea.vmem [#allocation3], %s198
        // Predicated region
        $region29: #{tpu_custom_call.1} parent=27 // pred_check
          %p200 = pneg %p61
        $region30: #{tpu_custom_call.1} parent=27 // pred_check_branch
          %202 = sbr.rel (%p200) target = $region32
        $region31: #{tpu_custom_call.1} parent=27 // pred_region
          %204 = dma.done %s196, 256
        $region32: #{tpu_custom_call.1} parent=27 // pred_fallthru
          _
        %s205 = sand.u32 %s80, 1
        %s206 = scalar_lea.sflag [#allocation7], %s205
        %s207 = sand.u32 %s80, 1
        %s208 = smul.addr %s207, 16
        %s209 = scalar_lea.vmem [#allocation6], %s208
        // Predicated region
        $region33: #{tpu_custom_call.1} parent=27 // pred_check
          %p210 = pneg %p93
        $region34: #{tpu_custom_call.1} parent=27 // pred_check_branch
          %212 = sbr.rel (%p210) target = $region36
        $region35: #{tpu_custom_call.1} parent=27 // pred_region
          %214 = dma.done %s206, 256
        $region36: #{tpu_custom_call.1} parent=27 // pred_fallthru
          _
        %s215 = sand.u32 %s48, 1
        %s216 = scalar_lea.sflag [#allocation4], %s215
        %s217 = sand.u32 %s48, 1
        %s218 = smul.addr %s217, 16
        %s219 = scalar_lea.vmem [#allocation3], %s218
        %p220 = pneg %p61
        %p221 = pneg %p58
        %s222 = sand.u32 %s80, 1
        %s223 = scalar_lea.sflag [#allocation7], %s222
        %s224 = sand.u32 %s80, 1
        %s225 = smul.addr %s224, 16
        %s226 = scalar_lea.vmem [#allocation6], %s225
        %p227 = pneg %p93
        %p228 = pneg %p90
        %p229 = pneg %p119
        %p230 = pneg %p116
        %s231 = sand.u32 %s106, 1
        %s232 = scalar_lea.sflag [#allocation5], %s231
        %s233 = sand.u32 %s106, 1
        %s234 = smul.addr %s233, 2
        %s235 = scalar_lea.vmem [#allocation8], %s234
        %s236 = sadd.s32 %s26, %s27
        %p237 = scmp.lt.s32.totalorder %s236, 0
        %s238 = scalar_select %p237, %s236, 0
        %s239 = smul.u32 2, %s238
        %s240 = sadd.s32 %s26, %s27
        %p241 = scmp.lt.s32.totalorder %s240, 0
        %s242 = scalar_select %p241, %s240, 0
        %s243 = smul.u32 2, %s242
        %p244 = scmp.eq.s32.totalorder %s27, 0
        // Predicated region
        $region37: #{tpu_custom_call.1} parent=27 // pred_check
          %p245 = pneg %p244
        $region38: #{tpu_custom_call.1} parent=27 // pred_check_branch
          %247 = sbr.rel (%p245) target = $region40
        $region39: #{tpu_custom_call.1} parent=27 // pred_region
          %248 = vst [vmem:[#allocation2] sm:$0xff] 0.0
          %249 = vst [vmem:[#allocation2 + $0x8] sm:$0xff] 0.0
          %250 = vst [vmem:[#allocation2 + $0x10] sm:$0xff] 0.0
          %251 = vst [vmem:[#allocation2 + $0x18] sm:$0xff] 0.0
        $region40: #{tpu_custom_call.1} parent=27 // pred_fallthru
          _
        %v252 = vld [vmem:[%s199] sm:$0xff]
        %v253 = vld [vmem:[%s199 + $0x8] sm:$0xff]
        %v254 = vld [vmem:[%s209] sm:$0xff]
        %v255 = vld [vmem:[%s209 + $0x8] sm:$0xff]
        %s256 = sadd.s32 %s26, %s27
        %s257 = smul.u32 %s256, 16
        %v258 = vlaneseq
        %v259 = vshrl.u32 %v258, 7
        %v260 = vadd.s32 %v259, 8
        %v261 = vstv %s257
        %v262 = vadd.s32 %v261, %v259
        %v263 = vadd.s32 %v261, %v260
        %vm264 = vcmp.lt.s32.totalorder %v262, 16
        %vm265 = vcmp.lt.s32.totalorder %v263, 16
        %v266 = vsel %vm264, %v252, 0.0
        %v267 = vsel %vm265, %v253, 0.0
        %v268 = vsel %vm264, %v254, 0.0
        %v269 = vsel %vm265, %v255, 0.0
        %v270 = vld [vmem:[#allocation2] sm:$0xff]
        %v271 = vld [vmem:[#allocation2 + $0x8] sm:$0xff]
        %v272 = vmul.f32 %v266, %v268
        %v273 = vmul.f32 %v267, %v269
        %v274 = vadd.f32 %v270, %v272
        %v275 = vadd.f32 %v271, %v273
        %276 = vst [vmem:[#allocation2] sm:$0xff] %v274
        %277 = vst [vmem:[#allocation2 + $0x8] sm:$0xff] %v275
        %s278 = scalar_lea.vmem [#allocation2], 16
        %v279 = vld [vmem:[%s278] sm:$0xff]
        %v280 = vld [vmem:[%s278 + $0x8] sm:$0xff]
        %v281 = vadd.f32 %v266, %v268
        %v282 = vadd.f32 %v267, %v269
        %v283 = vadd.f32 %v279, %v281
        %v284 = vadd.f32 %v280, %v282
        %285 = vst [vmem:[%s278] sm:$0xff] %v283
        %286 = vst [vmem:[%s278 + $0x8] sm:$0xff] %v284
        // Predicated region
        $region41: #{tpu_custom_call.1} parent=27 // pred_check
          %p287 = pneg %p244
        $region42: #{tpu_custom_call.1} parent=27 // pred_check_branch
          %289 = sbr.rel (%p287) target = $region44
        $region43: #{tpu_custom_call.1} parent=27 // pred_region
          %v290 = vld [vmem:[#allocation2] sm:$0xff]
          %v291 = vld [vmem:[#allocation2 + $0x8] sm:$0xff]
          %v292 = vadd.f32 %v290, %v291
          %v293 = vrot.slane %v292, 4
          %v294 = vadd.f32 %v292, %v293
          %v295 = vrot.slane %v294, 2
          %v296 = vadd.f32 %v294, %v295
          %v297 = vrot.slane %v296, 1
          %v298 = vadd.f32 %v296, %v297
          %299 = vst [vmem:[%s235] sm:$0x1] %v298
          %v300 = vld [vmem:[%s278] sm:$0xff]
          %v301 = vld [vmem:[%s278 + $0x8] sm:$0xff]
          %v302 = vadd.f32 %v300, %v301
          %v303 = vrot.slane %v302, 4
          %v304 = vadd.f32 %v302, %v303
          %v305 = vrot.slane %v304, 2
          %v306 = vadd.f32 %v304, %v305
          %v307 = vrot.slane %v306, 1
          %v308 = vadd.f32 %v306, %v307
          %s309 = scalar_lea.vmem %s235, 1 [#allocation8]
          %310 = vst [vmem:[%s309] sm:$0x1] %v308
        $region44: #{tpu_custom_call.1} parent=27 // pred_fallthru
          _
        %s311 = sand.u32 %s106, 1
        %s312 = scalar_lea.sflag [#allocation5], %s311
        %s313 = sand.u32 %s106, 1
        %s314 = smul.addr %s313, 2
        %s315 = scalar_lea.vmem [#allocation8], %s314
        // Predicated region
        $region45: #{tpu_custom_call.1} parent=27 // pred_check
          %p316 = pneg %p116
        $region46: #{tpu_custom_call.1} parent=27 // pred_check_branch
          %318 = sbr.rel (%p316) target = $region48
        $region47: #{tpu_custom_call.1} parent=27 // pred_region
          %320 = vsyncadd %s312, 0
          %s321 = smul.addr %s26, 2
          %s322 = scalar_lea.hbm %s2, %s321
          %s323 = sshll.u32 %s315, 4
          %s324 = int_to_ptr.vmem [resolvable:$true] %s323
          %s325 = sshll.u32 %s322, 4
          %s326 = int_to_ptr.hbm [resolvable:$true] %s325
          %331 = dma.vmem_to_hbm [thread:$0]  %s324, 32, %s326, %s312, 16, 16, 1
        $region48: #{tpu_custom_call.1} parent=27 // pred_fallthru
          _
      $region28: #{tpu_custom_call.1} parent=5 // pred_fallthru
        _
      %p332 = scmp.le.s32.totalorder 2, %s17
      // Predicated region
      $region49: #{tpu_custom_call.1} parent=5 // pred_check
        %p333 = pneg %p332
      $region50: #{tpu_custom_call.1} parent=5 // pred_check_branch
        %335 = sbr.rel (%p333) target = $region52
      $region51: #{tpu_custom_call.1} parent=5 // pred_region
        %s336 = ssub.s32 %s17, 2
        // Predicated region
        $region53: #{tpu_custom_call.1} parent=51 // pred_check
          %p337 = pneg %p122
        $region54: #{tpu_custom_call.1} parent=51 // pred_check_branch
          %339 = sbr.rel (%p337) target = $region56
        $region55: #{tpu_custom_call.1} parent=51 // pred_region
          %s340 = sand.u32 %s107, 1
          %s341 = scalar_lea.sflag [#allocation5], %s340
          %s342 = sand.u32 %s107, 1
          %s343 = smul.addr %s342, 2
          %s344 = scalar_lea.vmem [#allocation8], %s343
          %346 = dma.done %s341, 32
        $region56: #{tpu_custom_call.1} parent=51 // pred_fallthru
          _
      $region52: #{tpu_custom_call.1} parent=5 // pred_fallthru
        _
    $region6: #{tpu_custom_call.1} parent=1 // loop_footer
      %s21 = sadd.s32 1, %s17
    $region7: #{tpu_custom_call.1} parent=1 // loop_footer_branch
      %16 = sbr.rel target = $region3
    $region8: #{tpu_custom_call.1} parent=1 // loop_exit
      _
    %347 = vsyncpa [#allocation4], 1
    %s348 = scalar_lea.sflag [#allocation4], 1
    %349 = vsyncpa %s348, 1
    %350 = vsyncpa [#allocation7], 1
    %s351 = scalar_lea.sflag [#allocation7], 1
    %352 = vsyncpa %s351, 1
    %353 = vsyncpa [#allocation5], 1
    %s354 = scalar_lea.sflag [#allocation5], 1
    %355 = vsyncpa %s354, 1

</llo_original>
